<compile_context>
chip_gen: v5e
topology: v5e:2x2
jax: 0.10.0
libtpu: 0.0.40
codegen_flags: <defaults>
</compile_context>

<pallas_src>
import functools
import math

import jax
import jax.numpy as jnp
from jax.experimental import pallas as pl
from jax.experimental.pallas import tpu as pltpu

# ----------------------------- model config ---------------------------------
PATCH_SIZE = 14          # dinov2_vits14_reg patch size
EMBED_DIM = 256          # synthetic embed dim, multiple of 128 => lane-dense (real: 384)
NUM_HEADS = 2            # head_dim = 128 (real model head_dim = 64)
DEPTH = 2                # synthetic depth (real model: 12)
MLP_RATIO = 4
NUM_REG_TOKENS = 4       # _reg variant
LN_EPS = 1e-6            # DINOv2 LayerNorm eps
COS_EPS = 1e-8           # F.cosine_similarity default eps

IMNET_MEAN = (0.485, 0.456, 0.406)
IMNET_STD = (0.229, 0.224, 0.225)

VMEM_LIMIT = 48 * 1024 * 1024   # explicit budget; safe on v7x (64 MiB) and v5e/v6e
MATMUL_TILE_M = 512             # ~85% HBM roofline tile size for the M axis


# ----------------------------- small helpers --------------------------------
def _erf(x):
    # Abramowitz & Stegun 7.1.26 polynomial erf (|err| < 1.5e-7); exp/mul/add only.
    a1, a2, a3, a4, a5 = (0.254829592, -0.284496736, 1.421413741,
                          -1.453152027, 1.061405429)
    p = 0.3275911
    s = jnp.sign(x)
    ax = jnp.abs(x)
    t = 1.0 / (1.0 + p * ax)
    poly = t * (a1 + t * (a2 + t * (a3 + t * (a4 + t * a5))))
    return s * (1.0 - poly * jnp.exp(-ax * ax))


def _gelu_exact(x):
    # matches torch.nn.GELU() (erf-based)
    return 0.5 * x * (1.0 + _erf(x * (1.0 / math.sqrt(2.0))))


def _layer_norm(x, w, b, eps):
    mu = jnp.mean(x, axis=-1, keepdims=True)
    var = jnp.mean((x - mu) ** 2, axis=-1, keepdims=True)
    return (x - mu) * jax.lax.rsqrt(var + eps) * w + b


# ----------------------------- Pallas kernels --------------------------------
def _matmul_bias_kernel(x_ref, w_ref, b_ref, o_ref):
    # bf16 x bf16 -> f32 accumulate on the MXU
    y = jnp.dot(x_ref[...], w_ref[...], preferred_element_type=jnp.float32)
    o_ref[...] = (y + b_ref[...]).astype(o_ref.dtype)


def matmul_bias(x, w, b):
    """y = x @ w + b ; x:(M,K) bf16, w:(K,N) bf16, b:(1,N) f32. Tiled over M."""
    m, k = x.shape
    _, n = w.shape
    tm = min(MATMUL_TILE_M, m)
    return pl.pallas_call(
        _matmul_bias_kernel,
        grid=(pl.cdiv(m, tm),),
        out_shape=jax.ShapeDtypeStruct((m, n), jnp.float32),
        in_specs=[
            pl.BlockSpec((tm, k), lambda i: (i, 0)),
            pl.BlockSpec((k, n), lambda i: (0, 0)),
            pl.BlockSpec((1, n), lambda i: (0, 0)),
        ],
        out_specs=pl.BlockSpec((tm, n), lambda i: (i, 0)),
        compiler_params=pltpu.CompilerParams(
            dimension_semantics=("parallel",),
            vmem_limit_bytes=VMEM_LIMIT),
    )(x, w, b)


def _vit_block_kernel(x_ref, vecs_ref, bias_ref, qkvw_ref, projw_ref,
                      fc1w_ref, fc2w_ref, o_ref, *, num_heads, final):
    x = x_ref[0].astype(jnp.float32)                      # (N, D)
    n_tok, dim = x.shape
    head_dim = dim // num_heads
    scale = 1.0 / math.sqrt(head_dim)

    # packed per-block vectors: (10, D) f32
    vecs = vecs_ref[...]
    ln1_w, ln1_b, ls1 = vecs[0:1], vecs[1:2], vecs[2:3]
    ln2_w, ln2_b, ls2 = vecs[3:4], vecs[4:5], vecs[5:6]
    proj_b, fc2_b = vecs[6:7], vecs[7:8]

    bias = bias_ref[...]                                   # (1, 7D) f32
    qkv_b = bias[:, :3 * dim]
    fc1_b = bias[:, 3 * dim:]

    # ---- attention branch (pre-LN) ----
    xn = _layer_norm(x, ln1_w, ln1_b, LN_EPS)
    qkv = jnp.dot(xn.astype(jnp.bfloat16), qkvw_ref[...],
                  preferred_element_type=jnp.float32) + qkv_b      # (N, 3D) f32
    q = qkv[:, :dim]
    k = qkv[:, dim:2 * dim]
    v = qkv[:, 2 * dim:]

    def split_heads(t):
        # head_dim is a multiple of 128 -> lane-aligned slices, no masked loads
        return jnp.stack(
            [t[:, h * head_dim:(h + 1) * head_dim] for h in range(num_heads)],
            axis=0).astype(jnp.bfloat16)                   # (H, N, hd)

    qh, kh, vh = split_heads(q), split_heads(k), split_heads(v)

    # batched (leading-batch) MXU matmuls over heads
    s = jnp.einsum("hqd,hkd->hqk", qh, kh,
                   preferred_element_type=jnp.float32) * scale     # (H, N, N)
    s = s - jnp.max(s, axis=-1, keepdims=True)
    p = jnp.exp(s)
    p = p * pl.reciprocal(jnp.sum(p, axis=-1, keepdims=True), approx=True)
    o = jnp.einsum("hqk,hkd->hqd", p.astype(jnp.bfloat16), vh,
                   preferred_element_type=jnp.float32)             # (H, N, hd)

    # merge heads through the output projection; proj_w is pre-reshaped (H, hd, D),
    # so no concatenate / transpose is needed.
    proj = jnp.einsum("hqd,hdo->hqo", o.astype(jnp.bfloat16), projw_ref[...],
                      preferred_element_type=jnp.float32)          # (H, N, D)
    attn = jnp.sum(proj, axis=0) + proj_b                          # (N, D)
    x = x + ls1 * attn                                             # LayerScale residual

    # ---- MLP branch (pre-LN) ----
    xn = _layer_norm(x, ln2_w, ln2_b, LN_EPS)
    h1 = jnp.dot(xn.astype(jnp.bfloat16), fc1w_ref[...],
                 preferred_element_type=jnp.float32) + fc1_b
    h1 = _gelu_exact(h1)
    h2 = jnp.dot(h1.astype(jnp.bfloat16), fc2w_ref[...],
                 preferred_element_type=jnp.float32) + fc2_b
    x = x + ls2 * h2

    if final:
        # fused epilogue: final LayerNorm of the CLS token only (LN is per-token)
        norm_w, norm_b = vecs[8:9], vecs[9:10]
        cls = _layer_norm(x[0:1], norm_w, norm_b, LN_EPS)          # (1, D)
        o_ref[0] = cls.astype(o_ref.dtype)
    else:
        o_ref[0] = x.astype(o_ref.dtype)


def vit_block(x, blk, *, final=False):
    """One fused pre-LN DINOv2 block; if final, also applies the final LN and
    emits only the normalized CLS token.  Grid over batch, 'parallel'."""
    b, n, d = x.shape
    weights = (blk["vecs"], blk["bias"], blk["qkv_w"], blk["proj_w"],
               blk["fc1_w"], blk["fc2_w"])

    def const_spec(a):
        return pl.BlockSpec(a.shape, lambda i, nd=a.ndim: (0,) * nd)

    out_tokens = 1 if final else n
    return pl.pallas_call(
        functools.partial(_vit_block_kernel, num_heads=NUM_HEADS, final=final),
        grid=(b,),
        out_shape=jax.ShapeDtypeStruct((b, out_tokens, d), jnp.float32),
        in_specs=[pl.BlockSpec((1, n, d), lambda i: (i, 0, 0))]
                 + [const_spec(w) for w in weights],
        out_specs=pl.BlockSpec((1, out_tokens, d), lambda i: (i, 0, 0)),
        compiler_params=pltpu.CompilerParams(
            dimension_semantics=("parallel",),
            vmem_limit_bytes=VMEM_LIMIT),
    )(x, *weights)


def _cossim_sum_kernel(src_ref, dst_ref, o_ref):
    s = src_ref[...].astype(jnp.float32)          # (1, D)
    d = dst_ref[...].astype(jnp.float32)          # (T, D)
    s_norm = jnp.sqrt(jnp.sum(s * s, axis=-1, keepdims=True))      # (1, 1)
    d_norm = jnp.sqrt(jnp.sum(d * d, axis=-1, keepdims=True))      # (T, 1)
    dots = jnp.sum(s * d, axis=-1, keepdims=True)                  # (T, 1)
    denom = jnp.maximum(s_norm * d_norm, COS_EPS)  # torch clamps the *product*
    cos = dots * pl.reciprocal(denom, approx=True)
    o_ref[0, 0] = jnp.sum(cos)


def cosine_similarity_sum(src_feat, dst_feat):
    """sum_i cos_sim(src_feat[0], dst_feat[i]) -> scalar."""
    return pl.pallas_call(
        _cossim_sum_kernel,
        grid=(1,),
        out_shape=jax.ShapeDtypeStruct((1, 1), jnp.float32),
        in_specs=[
            pl.BlockSpec(src_feat.shape, lambda i: (0, 0)),
            pl.BlockSpec(dst_feat.shape, lambda i: (0, 0)),
        ],
        out_specs=pl.BlockSpec((1, 1), lambda i: (0, 0)),
        compiler_params=pltpu.CompilerParams(vmem_limit_bytes=VMEM_LIMIT),
    )(src_feat, dst_feat)[0, 0]


# ----------------------------- JAX glue --------------------------------------
def preprocess(image):
    """image: (B, 3, H, W) -> normalized + bilinear resize to multiple of 14."""
    image = image.astype(jnp.float32)
    mean = jnp.array(IMNET_MEAN, jnp.float32).reshape(1, 3, 1, 1)
    std = jnp.array(IMNET_STD, jnp.float32).reshape(1, 3, 1, 1)
    image = (image - mean) / std
    closest = int(math.ceil(image.shape[-1] / PATCH_SIZE) * PATCH_SIZE)
    image = jax.image.resize(
        image, (image.shape[0], 3, closest, closest), method="bilinear")
    return image


def patchify(x):
    """(B, C, H, W) -> (B, num_patches, C*p*p), flatten order (C, ph, pw)."""
    b, c, h, w = x.shape
    gh, gw = h // PATCH_SIZE, w // PATCH_SIZE
    x = x.reshape(b, c, gh, PATCH_SIZE, gw, PATCH_SIZE)
    x = x.transpose(0, 2, 4, 1, 3, 5)          # (B, gh, gw, C, ph, pw)
    return x.reshape(b, gh * gw, c * PATCH_SIZE * PATCH_SIZE)


def dino_features(images, params):
    """Synthetic DINOv2 forward: returns the normalized CLS token, (B, D)."""
    x = preprocess(images)
    patches = patchify(x)                                   # (B, P, 3*p*p)
    b, p, _ = patches.shape
    emb = matmul_bias(patches.reshape(b * p, -1).astype(jnp.bfloat16),
                      params["patch_w"], params["patch_b"])
    emb = emb.reshape(b, p, EMBED_DIM)

    cls = jnp.broadcast_to(params["cls_token"], (b, 1, EMBED_DIM))
    tok = jnp.concatenate([cls, emb], axis=1) + params["pos_embed"]
    reg = jnp.broadcast_to(params["reg_tokens"], (b, NUM_REG_TOKENS, EMBED_DIM))
    tok = jnp.concatenate([tok[:, :1], reg, tok[:, 1:]], axis=1)  # (B, 1+R+P, D)

    blocks = params["blocks"]
    for blk in blocks[:-1]:
        tok = vit_block(tok, blk)
    # last block fuses the final LayerNorm + CLS extraction
    cls_feat = vit_block(tok, blocks[-1], final=True)         # (B, 1, D)
    return cls_feat[:, 0]                                     # x_norm_clstoken


def dino_v2_similarity(src_image, tgt_images, params, batch_size=16):
    """Mirrors DinoV2Similarity.forward."""
    src_feat = dino_features(src_image, params)               # (1, D)
    num_tgt = tgt_images.shape[0]
    dist = jnp.zeros((), jnp.float32)
    for i in range(0, num_tgt, batch_size):
        dst_feat = dino_features(tgt_images[i:i + batch_size], params)
        dist = dist + cosine_similarity_sum(src_feat, dst_feat)
    return dist / num_tgt


# ----------------------------- parameter init --------------------------------
def init_params(key, num_patches):
    d = EMBED_DIM
    h = EMBED_DIM * MLP_RATIO
    keys = iter(jax.random.split(key, 64))

    def nrm(shape, scale=0.02):
        return scale * jax.random.normal(next(keys), shape, dtype=jnp.float32)

    params = {
        "patch_w": nrm((3 * PATCH_SIZE * PATCH_SIZE, d)),
        "patch_b": jnp.zeros((1, d), jnp.float32),
        "cls_token": nrm((1, 1, d)),
        "reg_tokens": nrm((1, NUM_REG_TOKENS, d)),
        "pos_embed": nrm((1, 1 + num_patches, d)),
        "norm_w": jnp.ones((1, d), jnp.float32),
        "norm_b": jnp.zeros((1, d), jnp.float32),
        "blocks": [],
    }
    for _ in range(DEPTH):
        params["blocks"].append({
            "ln1_w": jnp.ones((1, d), jnp.float32),
            "ln1_b": jnp.zeros((1, d), jnp.float32),
            "qkv_w": nrm((d, 3 * d)),
            "qkv_b": jnp.zeros((1, 3 * d), jnp.float32),
            "proj_w": nrm((d, d)),
            "proj_b": jnp.zeros((1, d), jnp.float32),
            "ls1": jnp.ones((1, d), jnp.float32),
            "ln2_w": jnp.ones((1, d), jnp.float32),
            "ln2_b": jnp.zeros((1, d), jnp.float32),
            "fc1_w": nrm((d, h)),
            "fc1_b": jnp.zeros((1, h), jnp.float32),
            "fc2_w": nrm((h, d)),
            "fc2_b": jnp.zeros((1, d), jnp.float32),
            "ls2": jnp.ones((1, d), jnp.float32),
        })
    return params


def pack_params(raw):
    """Kernel-ready layout: bf16 weight matrices, packed (10,D) vector slab,
    packed bias slab, proj_w pre-reshaped to (H, head_dim, D)."""
    d = EMBED_DIM
    hd = EMBED_DIM // NUM_HEADS
    packed = {
        "patch_w": raw["patch_w"].astype(jnp.bfloat16),
        "patch_b": raw["patch_b"],
        "cls_token": raw["cls_token"],
        "reg_tokens": raw["reg_tokens"],
        "pos_embed": raw["pos_embed"],
        "blocks": [],
    }
    for blk in raw["blocks"]:
        vecs = jnp.concatenate([
            blk["ln1_w"], blk["ln1_b"], blk["ls1"],
            blk["ln2_w"], blk["ln2_b"], blk["ls2"],
            blk["proj_b"], blk["fc2_b"],
            raw["norm_w"], raw["norm_b"],          # only used by the final block
        ], axis=0)                                 # (10, D) f32
        bias = jnp.concatenate([blk["qkv_b"], blk["fc1_b"]], axis=1)  # (1, 7D) f32
        packed["blocks"].append({
            "vecs": vecs,
            "bias": bias,
            "qkv_w": blk["qkv_w"].astype(jnp.bfloat16),
            "proj_w": blk["proj_w"].reshape(NUM_HEADS, hd, d).astype(jnp.bfloat16),
            "fc1_w": blk["fc1_w"].astype(jnp.bfloat16),
            "fc2_w": blk["fc2_w"].astype(jnp.bfloat16),
        })
    return packed


# ----------------------------- main -------------------------------------------
if __name__ == "__main__":
    key = jax.random.PRNGKey(0)
    k_src, k_tgt, k_par = jax.random.split(key, 3)

    # small shapes: 1 source image, 4 target images, 3x16x16 -> resized to 28x28
    src_image = jax.random.uniform(k_src, (1, 3, 16, 16), jnp.float32)
    tgt_images = jax.random.uniform(k_tgt, (4, 3, 16, 16), jnp.float32)

    closest = int(math.ceil(src_image.shape[-1] / PATCH_SIZE) * PATCH_SIZE)
    num_patches = (closest // PATCH_SIZE) ** 2

    # TODO(synk): torch.hub pretrained weights are replaced by deterministic
    # synthetic initialization; no checkpoint is loaded.
    params = pack_params(init_params(k_par, num_patches))

    dist = dino_v2_similarity(src_image, tgt_images, params, batch_size=2)
    jax.block_until_ready(dist)
    print("KERNEL_OK")
</pallas_src>

<mosaic_0001>
module attributes {stable_mosaic.version = 11 : i64} {
  func.func @_matmul_bias_kernel(%arg0: i32, %arg1: memref<4x588xbf16, #tpu.memory_space<vmem>>, %arg2: memref<588x256xbf16, #tpu.memory_space<vmem>>, %arg3: memref<1x256xf32, #tpu.memory_space<vmem>>, %arg4: memref<4x256xf32, #tpu.memory_space<vmem>>) attributes {dimension_semantics = [#tpu.dimension_semantics<parallel>], iteration_bounds = array<i64: 1>, scalar_prefetch = 0 : i64, scratch_operands = 0 : i64, tpu.core_type = #tpu.core_type<tc>, window_params = [{transform_indices = @transform_0, window_bounds = array<i64: 4, 588>}, {pipeline_mode = #tpu.pipeline_mode<synchronous>, transform_indices = @transform_1, window_bounds = array<i64: 588, 256>}, {pipeline_mode = #tpu.pipeline_mode<synchronous>, transform_indices = @transform_2, window_bounds = array<i64: 1, 256>}, {transform_indices = @transform_3, window_bounds = array<i64: 4, 256>}]} {
    %c0 = arith.constant 0 : index
    %c0_0 = arith.constant 0 : index
    %0 = vector.load %arg1[%c0, %c0_0] : memref<4x588xbf16, #tpu.memory_space<vmem>>, vector<4x588xbf16>
    %c0_1 = arith.constant 0 : index
    %c0_2 = arith.constant 0 : index
    %1 = vector.load %arg2[%c0_1, %c0_2] : memref<588x256xbf16, #tpu.memory_space<vmem>>, vector<588x256xbf16>
    %cst = arith.constant dense<0.000000e+00> : vector<4x256xf32>
    %2 = tpu.matmul %0, %1, %cst {dimension_numbers = #tpu.dot_dimension_numbers<[1], [0], [0], [1], [0, 0, 1, 1], [], []>} : vector<4x588xbf16>, vector<588x256xbf16>, vector<4x256xf32> -> vector<4x256xf32>
    %c0_3 = arith.constant 0 : index
    %c0_4 = arith.constant 0 : index
    %3 = vector.load %arg3[%c0_3, %c0_4] : memref<1x256xf32, #tpu.memory_space<vmem>>, vector<1x256xf32>
    %4 = vector.broadcast %3 : vector<1x256xf32> to vector<4x256xf32>
    %5 = arith.addf %2, %4 : vector<4x256xf32>
    %c0_5 = arith.constant 0 : index
    %c0_6 = arith.constant 0 : index
    %6 = vector.load %arg4[%c0_5, %c0_6] : memref<4x256xf32, #tpu.memory_space<vmem>>, vector<4x256xf32>
    tpu.vector_store %arg4[%c0_5, %c0_6], %5 {strides = array<i32>} : memref<4x256xf32, #tpu.memory_space<vmem>>, vector<4x256xf32>,
    return
  }
  func.func @transform_0(%arg0: i32) -> (i32, i32) {
    %c0_i32 = arith.constant 0 : i32
    %c0_i32_0 = arith.constant 0 : i32
    return %arg0, %c0_i32 : i32, i32
  }
  func.func @transform_1(%arg0: i32) -> (i32, i32) {
    %c0_i32 = arith.constant 0 : i32
    %c0_i32_0 = arith.constant 0 : i32
    %c0_i32_1 = arith.constant 0 : i32
    return %c0_i32, %c0_i32_0 : i32, i32
  }
  func.func @transform_2(%arg0: i32) -> (i32, i32) {
    %c0_i32 = arith.constant 0 : i32
    %c0_i32_0 = arith.constant 0 : i32
    %c0_i32_1 = arith.constant 0 : i32
    return %c0_i32, %c0_i32_0 : i32, i32
  }
  func.func @transform_3(%arg0: i32) -> (i32, i32) {
    %c0_i32 = arith.constant 0 : i32
    %c0_i32_0 = arith.constant 0 : i32
    return %arg0, %c0_i32 : i32, i32
  }
}

</mosaic_0001>

<llo_original>
// kernel: tpu_custom_call.1
$region0: #{tpu_custom_call.1}
  #allocation0 [shape = 'u32[]', space=smem, size = 0x4, offset = 0x4, fixed_abs, tag = 'smem constant byte address 0x4 - core index']
  #allocation1 [shape = 'u32[72,128]{1,0:T(1,128)}', space=vmem, size = 0x9000, scoped, tag = 'internal scratch']
  %s0 = inlined_call_operand.hbm [shape: bf16[4,588], index: 0, kind: input, shape index: {}]
  %s1 = inlined_call_operand.hbm [shape: bf16[588,256], index: 1, kind: input, shape index: {}]
  %s2 = inlined_call_operand.hbm [shape: f32[1,256], index: 2, kind: input, shape index: {}]
  %s3 = inlined_call_operand.hbm [shape: f32[4,256], index: 3, kind: output, shape index: {}]
  %s4 = sld [smem:[#allocation0]]
  $region34: #{tpu_custom_call.1} parent=0
    _
  %s6 = ssub.s32 1, %s4
  %s7 = scalar_select 0, %s6, %s4
  $region1: #{tpu_custom_call.1} parent=0
    #allocation2 [shape = 'u8[5120]{0}', space=vmem, size = 0x1400, scoped, tag = 'input window, operand 0, single buffered']
    #allocation3 [shape = 's32[1]{0}', space=sflag, size = 0x4, scoped, tag = 'scoped memory for tpu_custom_call.1']
    #allocation4 [shape = 's32[1]{0}', space=sflag, size = 0x4, scoped, tag = 'scoped memory for tpu_custom_call.1']
    #allocation5 [shape = 'u8[303104]{0}', space=vmem, size = 0x4a000, scoped, tag = 'input window, operand 1, single buffered']
    #allocation6 [shape = 's32[1]{0}', space=sflag, size = 0x4, scoped, tag = 'scoped memory for tpu_custom_call.1']
    #allocation7 [shape = 'u8[1024]{0}', space=vmem, size = 0x400, scoped, tag = 'input window, operand 2, single buffered']
    #allocation8 [shape = 'u8[4096]{0}', space=vmem, size = 0x1000, scoped, tag = 'output window, operand 0, single buffered']
    %8 = vsyncpa [#allocation3], 0
    %9 = vsyncpa [#allocation6], 0
    %10 = vsyncpa [#allocation4], 0
    // Predicated region
    $region2: #{tpu_custom_call.1} parent=1 // pred_check
      _
    $region3: #{tpu_custom_call.1} parent=1 // pred_check_branch
      %12 = sbr.rel (0) target = $region5
    $region4: #{tpu_custom_call.1} parent=1 // pred_region
      %14 = vsyncadd [#allocation3], 0
      %s16 = sshll.u32 %s0, 4
      %s17 = int_to_ptr.hbm [resolvable:$true] %s16
      %s18 = sshll.u32 [#allocation2], 4
      %s19 = int_to_ptr.vmem [resolvable:$true] %s18
      %21 = dma.hbm_to_vmem [thread:$0]  %s17, 160, %s19, [#allocation3]
    $region5: #{tpu_custom_call.1} parent=1 // pred_fallthru
      _
    // Predicated region
    $region6: #{tpu_custom_call.1} parent=1 // pred_check
      _
    $region7: #{tpu_custom_call.1} parent=1 // pred_check_branch
      %23 = sbr.rel (0) target = $region9
    $region8: #{tpu_custom_call.1} parent=1 // pred_region
      %25 = vsyncadd [#allocation6], 0
      %s26 = sshll.u32 %s1, 4
      %s27 = int_to_ptr.hbm [resolvable:$true] %s26
      %s28 = sshll.u32 [#allocation5], 4
      %s29 = int_to_ptr.vmem [resolvable:$true] %s28
      %34 = dma.hbm_to_vmem [thread:$0]  %s27, 9472, %s29, [#allocation6], 128, 128, 8
    $region9: #{tpu_custom_call.1} parent=1 // pred_fallthru
      _
    // Predicated region
    $region10: #{tpu_custom_call.1} parent=1 // pred_check
      _
    $region11: #{tpu_custom_call.1} parent=1 // pred_check_branch
      %36 = sbr.rel (0) target = $region13
    $region12: #{tpu_custom_call.1} parent=1 // pred_region
      %38 = vsyncadd [#allocation6], 0
      %s40 = sshll.u32 %s2, 4
      %s41 = int_to_ptr.hbm [resolvable:$true] %s40
      %s42 = sshll.u32 [#allocation7], 4
      %s43 = int_to_ptr.vmem [resolvable:$true] %s42
      %45 = dma.hbm_to_vmem [thread:$0]  %s41, 32, %s43, [#allocation6]
    $region13: #{tpu_custom_call.1} parent=1 // pred_fallthru
      _
    // Predicated region
    $region14: #{tpu_custom_call.1} parent=1 // pred_check
      _
    $region15: #{tpu_custom_call.1} parent=1 // pred_check_branch
      %47 = sbr.rel (0) target = $region17
    $region16: #{tpu_custom_call.1} parent=1 // pred_region
      %49 = dma.done [#allocation3], 160
    $region17: #{tpu_custom_call.1} parent=1 // pred_fallthru
      _
    // Predicated region
    $region18: #{tpu_custom_call.1} parent=1 // pred_check
      _
    $region19: #{tpu_custom_call.1} parent=1 // pred_check_branch
      %51 = sbr.rel (0) target = $region21
    $region20: #{tpu_custom_call.1} parent=1 // pred_region
      %53 = dma.done [#allocation6], 9472
    $region21: #{tpu_custom_call.1} parent=1 // pred_fallthru
      _
    // Predicated region
    $region22: #{tpu_custom_call.1} parent=1 // pred_check
      _
    $region23: #{tpu_custom_call.1} parent=1 // pred_check_branch
      %55 = sbr.rel (0) target = $region25
    $region24: #{tpu_custom_call.1} parent=1 // pred_region
      %57 = dma.done [#allocation6], 32
    $region25: #{tpu_custom_call.1} parent=1 // pred_fallthru
      _
    %v59 = vld [vmem:[#allocation2] sm:$0xff]
    %v60 = vld [vmem:[#allocation2 + $0x8] sm:$0x3]
    %v61 = vld [vmem:[#allocation5] sm:$0xff]
    %v62 = vld [vmem:[#allocation5 + $0x8] sm:$0xff]
    %v63 = vld [vmem:[#allocation5 + $0x10] sm:$0xff]
    %v64 = vld [vmem:[#allocation5 + $0x18] sm:$0xff]
    %v65 = vld [vmem:[#allocation5 + $0x20] sm:$0xff]
    %v66 = vld [vmem:[#allocation5 + $0x28] sm:$0xff]
    %v67 = vld [vmem:[#allocation5 + $0x30] sm:$0xff]
    %v68 = vld [vmem:[#allocation5 + $0x38] sm:$0xff]
    %v69 = vld [vmem:[#allocation5 + $0x40] sm:$0xff]
    %v70 = vld [vmem:[#allocation5 + $0x48] sm:$0xff]
    %v71 = vld [vmem:[#allocation5 + $0x50] sm:$0xff]
    %v72 = vld [vmem:[#allocation5 + $0x58] sm:$0xff]
    %v73 = vld [vmem:[#allocation5 + $0x60] sm:$0xff]
    %v74 = vld [vmem:[#allocation5 + $0x68] sm:$0xff]
    %v75 = vld [vmem:[#allocation5 + $0x70] sm:$0xff]
    %v76 = vld [vmem:[#allocation5 + $0x78] sm:$0xff]
    %v77 = vld [vmem:[#allocation5 + $0x80] sm:$0xff]
    %v78 = vld [vmem:[#allocation5 + $0x88] sm:$0xff]
    %v79 = vld [vmem:[#allocation5 + $0x90] sm:$0xff]
    %v80 = vld [vmem:[#allocation5 + $0x98] sm:$0xff]
    %v81 = vld [vmem:[#allocation5 + $0xa0] sm:$0xff]
    %v82 = vld [vmem:[#allocation5 + $0xa8] sm:$0xff]
    %v83 = vld [vmem:[#allocation5 + $0xb0] sm:$0xff]
    %v84 = vld [vmem:[#allocation5 + $0xb8] sm:$0xff]
    %v85 = vld [vmem:[#allocation5 + $0xc0] sm:$0xff]
    %v86 = vld [vmem:[#allocation5 + $0xc8] sm:$0xff]
    %v87 = vld [vmem:[#allocation5 + $0xd0] sm:$0xff]
    %v88 = vld [vmem:[#allocation5 + $0xd8] sm:$0xff]
    %v89 = vld [vmem:[#allocation5 + $0xe0] sm:$0xff]
    %v90 = vld [vmem:[#allocation5 + $0xe8] sm:$0xff]
    %v91 = vld [vmem:[#allocation5 + $0xf0] sm:$0xff]
    %v92 = vld [vmem:[#allocation5 + $0xf8] sm:$0xff]
    %v93 = vld [vmem:[#allocation5 + $0x100] sm:$0xff]
    %v94 = vld [vmem:[#allocation5 + $0x108] sm:$0xff]
    %v95 = vld [vmem:[#allocation5 + $0x110] sm:$0xff]
    %v96 = vld [vmem:[#allocation5 + $0x118] sm:$0xff]
    %v97 = vld [vmem:[#allocation5 + $0x120] sm:$0xff]
    %v98 = vld [vmem:[#allocation5 + $0x128] sm:$0xff]
    %v99 = vld [vmem:[#allocation5 + $0x130] sm:$0xff]
    %v100 = vld [vmem:[#allocation5 + $0x138] sm:$0xff]
    %v101 = vld [vmem:[#allocation5 + $0x140] sm:$0xff]
    %v102 = vld [vmem:[#allocation5 + $0x148] sm:$0xff]
    %v103 = vld [vmem:[#allocation5 + $0x150] sm:$0xff]
    %v104 = vld [vmem:[#allocation5 + $0x158] sm:$0xff]
    %v105 = vld [vmem:[#allocation5 + $0x160] sm:$0xff]
    %v106 = vld [vmem:[#allocation5 + $0x168] sm:$0xff]
    %v107 = vld [vmem:[#allocation5 + $0x170] sm:$0xff]
    %v108 = vld [vmem:[#allocation5 + $0x178] sm:$0xff]
    %v109 = vld [vmem:[#allocation5 + $0x180] sm:$0xff]
    %v110 = vld [vmem:[#allocation5 + $0x188] sm:$0xff]
    %v111 = vld [vmem:[#allocation5 + $0x190] sm:$0xff]
    %v112 = vld [vmem:[#allocation5 + $0x198] sm:$0xff]
    %v113 = vld [vmem:[#allocation5 + $0x1a0] sm:$0xff]
    %v114 = vld [vmem:[#allocation5 + $0x1a8] sm:$0xff]
    %v115 = vld [vmem:[#allocation5 + $0x1b0] sm:$0xff]
    %v116 = vld [vmem:[#allocation5 + $0x1b8] sm:$0xff]
    %v117 = vld [vmem:[#allocation5 + $0x1c0] sm:$0xff]
    %v118 = vld [vmem:[#allocation5 + $0x1c8] sm:$0xff]
    %v119 = vld [vmem:[#allocation5 + $0x1d0] sm:$0xff]
    %v120 = vld [vmem:[#allocation5 + $0x1d8] sm:$0xff]
    %v121 = vld [vmem:[#allocation5 + $0x1e0] sm:$0xff]
    %v122 = vld [vmem:[#allocation5 + $0x1e8] sm:$0xff]
    %v123 = vld [vmem:[#allocation5 + $0x1f0] sm:$0xff]
    %v124 = vld [vmem:[#allocation5 + $0x1f8] sm:$0xff]
    %v125 = vld [vmem:[#allocation5 + $0x200] sm:$0xff]
    %v126 = vld [vmem:[#allocation5 + $0x208] sm:$0xff]
    %v127 = vld [vmem:[#allocation5 + $0x210] sm:$0xff]
    %v128 = vld [vmem:[#allocation5 + $0x218] sm:$0xff]
    %v129 = vld [vmem:[#allocation5 + $0x220] sm:$0xff]
    %v130 = vld [vmem:[#allocation5 + $0x228] sm:$0xff]
    %v131 = vld [vmem:[#allocation5 + $0x230] sm:$0xff]
    %v132 = vld [vmem:[#allocation5 + $0x238] sm:$0xff]
    %v133 = vld [vmem:[#allocation5 + $0x240] sm:$0xff]
    %v134 = vld [vmem:[#allocation5 + $0x248] sm:$0x33]
    %v135 = vld [vmem:[#allocation7] sm:$0x3]
    %v137 = vperm.slane %v135, 0
    %v138 = vperm.slane %v135, 1
    %142 = vst [vmem:[#allocation1] ss:$4 sm:$0xff] %v59
    %s144 = scalar_lea.vmem [#allocation1], 32
    %145 = vst [vmem:[%s144] ss:$4 sm:$0xff] %v60
    %v146 = vld.sshfl [vmem:[#allocation1] sm:$0xff pattern:$0x73625140]
    %v147 = vld.sshfl [vmem:[#allocation1 + $0x8] sm:$0xff pattern:$0x73625140]
    %v148 = vld.sshfl [vmem:[#allocation1 + $0x10] sm:$0xff pattern:$0x73625140]
    %v149 = vld.sshfl [vmem:[#allocation1 + $0x18] sm:$0xff pattern:$0x73625140]
    %v150 = vld.sshfl [vmem:[#allocation1 + $0x20] sm:$0xff pattern:$0x73625140]
    %v229 = vunpack.c.l.b16 %v61
    %v230 = vunpack.c.h.b16 %v61
    %v231 = vunpack.c.l.b16 %v62
    %v232 = vunpack.c.h.b16 %v62
    %v233 = vunpack.c.l.b16 %v63
    %v234 = vunpack.c.h.b16 %v63
    %v235 = vunpack.c.l.b16 %v64
    %v236 = vunpack.c.h.b16 %v64
    %v237 = vunpack.c.l.b16 %v65
    %v238 = vunpack.c.h.b16 %v65
    %v239 = vunpack.c.l.b16 %v66
    %v240 = vunpack.c.h.b16 %v66
    %v241 = vunpack.c.l.b16 %v67
    %v242 = vunpack.c.h.b16 %v67
    %v243 = vunpack.c.l.b16 %v68
    %v244 = vunpack.c.h.b16 %v68
    %v245 = vunpack.c.l.b16 %v69
    %v246 = vunpack.c.h.b16 %v69
    %v247 = vunpack.c.l.b16 %v70
    %v248 = vunpack.c.h.b16 %v70
    %v249 = vunpack.c.l.b16 %v71
    %v250 = vunpack.c.h.b16 %v71
    %v251 = vunpack.c.l.b16 %v72
    %v252 = vunpack.c.h.b16 %v72
    %v253 = vunpack.c.l.b16 %v73
    %v254 = vunpack.c.h.b16 %v73
    %v255 = vunpack.c.l.b16 %v74
    %v256 = vunpack.c.h.b16 %v74
    %v257 = vunpack.c.l.b16 %v75
    %v258 = vunpack.c.h.b16 %v75
    %v259 = vunpack.c.l.b16 %v76
    %v260 = vunpack.c.h.b16 %v76
    %v261 = vunpack.c.l.b16 %v77
    %v262 = vunpack.c.h.b16 %v77
    %v263 = vunpack.c.l.b16 %v78
    %v264 = vunpack.c.h.b16 %v78
    %v265 = vunpack.c.l.b16 %v79
    %v266 = vunpack.c.h.b16 %v79
    %v267 = vunpack.c.l.b16 %v80
    %v268 = vunpack.c.h.b16 %v80
    %v269 = vunpack.c.l.b16 %v81
    %v270 = vunpack.c.h.b16 %v81
    %v271 = vunpack.c.l.b16 %v82
    %v272 = vunpack.c.h.b16 %v82
    %v273 = vunpack.c.l.b16 %v83
    %v274 = vunpack.c.h.b16 %v83
    %v275 = vunpack.c.l.b16 %v84
    %v276 = vunpack.c.h.b16 %v84
    %v277 = vunpack.c.l.b16 %v85
    %v278 = vunpack.c.h.b16 %v85
    %v279 = vunpack.c.l.b16 %v86
    %v280 = vunpack.c.h.b16 %v86
    %v281 = vunpack.c.l.b16 %v87
    %v282 = vunpack.c.h.b16 %v87
    %v283 = vunpack.c.l.b16 %v88
    %v284 = vunpack.c.h.b16 %v88
    %v285 = vunpack.c.l.b16 %v89
    %v286 = vunpack.c.h.b16 %v89
    %v287 = vunpack.c.l.b16 %v90
    %v288 = vunpack.c.h.b16 %v90
    %v289 = vunpack.c.l.b16 %v91
    %v290 = vunpack.c.h.b16 %v91
    %v291 = vunpack.c.l.b16 %v92
    %v292 = vunpack.c.h.b16 %v92
    %v293 = vunpack.c.l.b16 %v93
    %v294 = vunpack.c.h.b16 %v93
    %v295 = vunpack.c.l.b16 %v94
    %v296 = vunpack.c.h.b16 %v94
    %v297 = vunpack.c.l.b16 %v95
    %v298 = vunpack.c.h.b16 %v95
    %v299 = vunpack.c.l.b16 %v96
    %v300 = vunpack.c.h.b16 %v96
    %v301 = vunpack.c.l.b16 %v97
    %v302 = vunpack.c.h.b16 %v97
    %v303 = vunpack.c.l.b16 %v98
    %v304 = vunpack.c.h.b16 %v98
    %v305 = vunpack.c.l.b16 %v99
    %v306 = vunpack.c.h.b16 %v99
    %v307 = vunpack.c.l.b16 %v100
    %v308 = vunpack.c.h.b16 %v100
    %v309 = vunpack.c.l.b16 %v101
    %v310 = vunpack.c.h.b16 %v101
    %v311 = vunpack.c.l.b16 %v102
    %v312 = vunpack.c.h.b16 %v102
    %v313 = vunpack.c.l.b16 %v103
    %v314 = vunpack.c.h.b16 %v103
    %v315 = vunpack.c.l.b16 %v104
    %v316 = vunpack.c.h.b16 %v104
    %v317 = vunpack.c.l.b16 %v105
    %v318 = vunpack.c.h.b16 %v105
    %v319 = vunpack.c.l.b16 %v106
    %v320 = vunpack.c.h.b16 %v106
    %v321 = vunpack.c.l.b16 %v107
    %v322 = vunpack.c.h.b16 %v107
    %v323 = vunpack.c.l.b16 %v108
    %v324 = vunpack.c.h.b16 %v108
    %v325 = vunpack.c.l.b16 %v109
    %v326 = vunpack.c.h.b16 %v109
    %v327 = vunpack.c.l.b16 %v110
    %v328 = vunpack.c.h.b16 %v110
    %v329 = vunpack.c.l.b16 %v111
    %v330 = vunpack.c.h.b16 %v111
    %v331 = vunpack.c.l.b16 %v112
    %v332 = vunpack.c.h.b16 %v112
    %v333 = vunpack.c.l.b16 %v113
    %v334 = vunpack.c.h.b16 %v113
    %v335 = vunpack.c.l.b16 %v114
    %v336 = vunpack.c.h.b16 %v114
    %v337 = vunpack.c.l.b16 %v115
    %v338 = vunpack.c.h.b16 %v115
    %v339 = vunpack.c.l.b16 %v116
    %v340 = vunpack.c.h.b16 %v116
    %v341 = vunpack.c.l.b16 %v117
    %v342 = vunpack.c.h.b16 %v117
    %v343 = vunpack.c.l.b16 %v118
    %v344 = vunpack.c.h.b16 %v118
    %v345 = vunpack.c.l.b16 %v119
    %v346 = vunpack.c.h.b16 %v119
    %v347 = vunpack.c.l.b16 %v120
    %v348 = vunpack.c.h.b16 %v120
    %v349 = vunpack.c.l.b16 %v121
    %v350 = vunpack.c.h.b16 %v121
    %v351 = vunpack.c.l.b16 %v122
    %v352 = vunpack.c.h.b16 %v122
    %v353 = vunpack.c.l.b16 %v123
    %v354 = vunpack.c.h.b16 %v123
    %v355 = vunpack.c.l.b16 %v124
    %v356 = vunpack.c.h.b16 %v124
    %v357 = vunpack.c.l.b16 %v125
    %v358 = vunpack.c.h.b16 %v125
    %v359 = vunpack.c.l.b16 %v126
    %v360 = vunpack.c.h.b16 %v126
    %v361 = vunpack.c.l.b16 %v127
    %v362 = vunpack.c.h.b16 %v127
    %v363 = vunpack.c.l.b16 %v128
    %v364 = vunpack.c.h.b16 %v128
    %v365 = vunpack.c.l.b16 %v129
    %v366 = vunpack.c.h.b16 %v129
    %v367 = vunpack.c.l.b16 %v130
    %v368 = vunpack.c.h.b16 %v130
    %v369 = vunpack.c.l.b16 %v131
    %v370 = vunpack.c.h.b16 %v131
    %v371 = vunpack.c.l.b16 %v132
    %v372 = vunpack.c.h.b16 %v132
    %v373 = vunpack.c.l.b16 %v133
    %v374 = vunpack.c.h.b16 %v133
    %v375 = vunpack.c.l.b16 %v134
    %v376 = vunpack.c.h.b16 %v134
    %v377 = vpack.c.b16 %v231, %v229
    %v378 = vpack.c.b16 %v232, %v230
    %v379 = vpack.c.b16 %v235, %v233
    %v380 = vpack.c.b16 %v236, %v234
    %v381 = vpack.c.b16 %v239, %v237
    %v382 = vpack.c.b16 %v240, %v238
    %v383 = vpack.c.b16 %v243, %v241
    %v384 = vpack.c.b16 %v244, %v242
    %v385 = vpack.c.b16 %v247, %v245
    %v386 = vpack.c.b16 %v248, %v246
    %v387 = vpack.c.b16 %v251, %v249
    %v388 = vpack.c.b16 %v252, %v250
    %v389 = vpack.c.b16 %v255, %v253
    %v390 = vpack.c.b16 %v256, %v254
    %v391 = vpack.c.b16 %v259, %v257
    %v392 = vpack.c.b16 %v260, %v258
    %v393 = vpack.c.b16 %v263, %v261
    %v394 = vpack.c.b16 %v264, %v262
    %v395 = vpack.c.b16 %v267, %v265
    %v396 = vpack.c.b16 %v268, %v266
    %v397 = vpack.c.b16 %v271, %v269
    %v398 = vpack.c.b16 %v272, %v270
    %v399 = vpack.c.b16 %v275, %v273
    %v400 = vpack.c.b16 %v276, %v274
    %v401 = vpack.c.b16 %v279, %v277
    %v402 = vpack.c.b16 %v280, %v278
    %v403 = vpack.c.b16 %v283, %v281
    %v404 = vpack.c.b16 %v284, %v282
    %v405 = vpack.c.b16 %v287, %v285
    %v406 = vpack.c.b16 %v288, %v286
    %v407 = vpack.c.b16 %v291, %v289
    %v408 = vpack.c.b16 %v292, %v290
    %v409 = vpack.c.b16 %v295, %v293
    %v410 = vpack.c.b16 %v296, %v294
    %v411 = vpack.c.b16 %v299, %v297
    %v412 = vpack.c.b16 %v300, %v298
    %v413 = vpack.c.b16 %v303, %v301
    %v414 = vpack.c.b16 %v304, %v302
    %v415 = vpack.c.b16 %v307, %v305
    %v416 = vpack.c.b16 %v308, %v306
    %v417 = vpack.c.b16 %v311, %v309
    %v418 = vpack.c.b16 %v312, %v310
    %v419 = vpack.c.b16 %v315, %v313
    %v420 = vpack.c.b16 %v316, %v314
    %v421 = vpack.c.b16 %v319, %v317
    %v422 = vpack.c.b16 %v320, %v318
    %v423 = vpack.c.b16 %v323, %v321
    %v424 = vpack.c.b16 %v324, %v322
    %v425 = vpack.c.b16 %v327, %v325
    %v426 = vpack.c.b16 %v328, %v326
    %v427 = vpack.c.b16 %v331, %v329
    %v428 = vpack.c.b16 %v332, %v330
    %v429 = vpack.c.b16 %v335, %v333
    %v430 = vpack.c.b16 %v336, %v334
    %v431 = vpack.c.b16 %v339, %v337
    %v432 = vpack.c.b16 %v340, %v338
    %v433 = vpack.c.b16 %v343, %v341
    %v434 = vpack.c.b16 %v344, %v342
    %v435 = vpack.c.b16 %v347, %v345
    %v436 = vpack.c.b16 %v348, %v346
    %v437 = vpack.c.b16 %v351, %v349
    %v438 = vpack.c.b16 %v352, %v350
    %v439 = vpack.c.b16 %v355, %v353
    %v440 = vpack.c.b16 %v356, %v354
    %v441 = vpack.c.b16 %v359, %v357
    %v442 = vpack.c.b16 %v360, %v358
    %v443 = vpack.c.b16 %v363, %v361
    %v444 = vpack.c.b16 %v364, %v362
    %v445 = vpack.c.b16 %v367, %v365
    %v446 = vpack.c.b16 %v368, %v366
    %v447 = vpack.c.b16 %v371, %v369
    %v448 = vpack.c.b16 %v372, %v370
    %v449 = vpack.c.b16 %v375, %v373
    %v450 = vpack.c.b16 %v376, %v374
    %vm523 = vcmask 621568
    %v524 = vsel %vm523, %v150, 0
    %vm526 = vcmask 1045504
    %v528 = vsel %vm526, %v449, 0
    %v531 = vsel %vm526, %v450, 0
    %533 = vmatpush.bf16.msra.mxu0 %v391
    %534 = vmatpush.bf16.msra.mxu0 %v389
    %535 = vmatpush.bf16.msra.mxu0 %v387
    %536 = vmatpush.bf16.msra.mxu0 %v385
    %537 = vmatpush.bf16.msra.mxu0 %v383
    %538 = vmatpush.bf16.msra.mxu0 %v381
    %539 = vmatpush.bf16.msra.mxu0 %v379
    %540 = vmatpush.bf16.msra.mxu0 %v377
    %541 = vmatmul.bf16.gmra.mxu0 %v146
    %v542 = vpop.f32.mrf.mxu0
    %v543 = vadd.f32 %v137, %v542
    %v544 = vpop.f32.mrf.mxu0
    %545 = vdwg.mxu0
    %546 = vmatpush.bf16.msra.mxu0 %v407
    %547 = vmatpush.bf16.msra.mxu0 %v405
    %548 = vmatpush.bf16.msra.mxu0 %v403
    %549 = vmatpush.bf16.msra.mxu0 %v401
    %550 = vmatpush.bf16.msra.mxu0 %v399
    %551 = vmatpush.bf16.msra.mxu0 %v397
    %552 = vmatpush.bf16.msra.mxu0 %v395
    %553 = vmatpush.bf16.msra.mxu0 %v393
    %554 = vmatmul.bf16.gmra.mxu0 %v147
    %v555 = vpop.f32.mrf.mxu0
    %v556 = vadd.f32 %v543, %v555
    %v557 = vpop.f32.mrf.mxu0
    %558 = vdwg.mxu0
    %559 = vmatpush.bf16.msra.mxu0 %v423
    %560 = vmatpush.bf16.msra.mxu0 %v421
    %561 = vmatpush.bf16.msra.mxu0 %v419
    %562 = vmatpush.bf16.msra.mxu0 %v417
    %563 = vmatpush.bf16.msra.mxu0 %v415
    %564 = vmatpush.bf16.msra.mxu0 %v413
    %565 = vmatpush.bf16.msra.mxu0 %v411
    %566 = vmatpush.bf16.msra.mxu0 %v409
    %567 = vmatmul.bf16.gmra.mxu0 %v148
    %v568 = vpop.f32.mrf.mxu0
    %v569 = vadd.f32 %v556, %v568
    %v570 = vpop.f32.mrf.mxu0
    %571 = vdwg.mxu0
    %572 = vmatpush.bf16.msra.mxu0 %v439
    %573 = vmatpush.bf16.msra.mxu0 %v437
    %574 = vmatpush.bf16.msra.mxu0 %v435
    %575 = vmatpush.bf16.msra.mxu0 %v433
    %576 = vmatpush.bf16.msra.mxu0 %v431
    %577 = vmatpush.bf16.msra.mxu0 %v429
    %578 = vmatpush.bf16.msra.mxu0 %v427
    %579 = vmatpush.bf16.msra.mxu0 %v425
    %580 = vmatmul.bf16.gmra.mxu0 %v149
    %v581 = vpop.f32.mrf.mxu0
    %v582 = vadd.f32 %v569, %v581
    %v583 = vpop.f32.mrf.mxu0
    %584 = vdwg.mxu0
    %585 = vmatpush.bf16.msra.mxu0 0
    %586 = vmatpush.bf16.msra.mxu0 0
    %587 = vmatpush.bf16.msra.mxu0 0
    %588 = vmatpush.bf16.msra.mxu0 %v528
    %589 = vmatpush.bf16.msra.mxu0 %v447
    %590 = vmatpush.bf16.msra.mxu0 %v445
    %591 = vmatpush.bf16.msra.mxu0 %v443
    %592 = vmatpush.bf16.msra.mxu0 %v441
    %593 = vmatmul.bf16.gmra.mxu0 %v524
    %v594 = vpop.f32.mrf.mxu0
    %v595 = vadd.f32 %v582, %v594
    %v596 = vpop.f32.mrf.mxu0
    %597 = vdwg.mxu0
    %598 = vmatpush.bf16.msra.mxu0 %v392
    %599 = vmatpush.bf16.msra.mxu0 %v390
    %600 = vmatpush.bf16.msra.mxu0 %v388
    %601 = vmatpush.bf16.msra.mxu0 %v386
    %602 = vmatpush.bf16.msra.mxu0 %v384
    %603 = vmatpush.bf16.msra.mxu0 %v382
    %604 = vmatpush.bf16.msra.mxu0 %v380
    %605 = vmatpush.bf16.msra.mxu0 %v378
    %606 = vmatmul.bf16.gmra.mxu0 %v146
    %v607 = vpop.f32.mrf.mxu0
    %v608 = vadd.f32 %v138, %v607
    %v609 = vpop.f32.mrf.mxu0
    %610 = vdwg.mxu0
    %611 = vmatpush.bf16.msra.mxu0 %v408
    %612 = vmatpush.bf16.msra.mxu0 %v406
    %613 = vmatpush.bf16.msra.mxu0 %v404
    %614 = vmatpush.bf16.msra.mxu0 %v402
    %615 = vmatpush.bf16.msra.mxu0 %v400
    %616 = vmatpush.bf16.msra.mxu0 %v398
    %617 = vmatpush.bf16.msra.mxu0 %v396
    %618 = vmatpush.bf16.msra.mxu0 %v394
    %619 = vmatmul.bf16.gmra.mxu0 %v147
    %v620 = vpop.f32.mrf.mxu0
    %v621 = vadd.f32 %v608, %v620
    %v622 = vpop.f32.mrf.mxu0
    %623 = vdwg.mxu0
    %624 = vmatpush.bf16.msra.mxu0 %v424
    %625 = vmatpush.bf16.msra.mxu0 %v422
    %626 = vmatpush.bf16.msra.mxu0 %v420
    %627 = vmatpush.bf16.msra.mxu0 %v418
    %628 = vmatpush.bf16.msra.mxu0 %v416
    %629 = vmatpush.bf16.msra.mxu0 %v414
    %630 = vmatpush.bf16.msra.mxu0 %v412
    %631 = vmatpush.bf16.msra.mxu0 %v410
    %632 = vmatmul.bf16.gmra.mxu0 %v148
    %v633 = vpop.f32.mrf.mxu0
    %v634 = vadd.f32 %v621, %v633
    %v635 = vpop.f32.mrf.mxu0
    %636 = vdwg.mxu0
    %637 = vmatpush.bf16.msra.mxu0 %v440
    %638 = vmatpush.bf16.msra.mxu0 %v438
    %639 = vmatpush.bf16.msra.mxu0 %v436
    %640 = vmatpush.bf16.msra.mxu0 %v434
    %641 = vmatpush.bf16.msra.mxu0 %v432
    %642 = vmatpush.bf16.msra.mxu0 %v430
    %643 = vmatpush.bf16.msra.mxu0 %v428
    %644 = vmatpush.bf16.msra.mxu0 %v426
    %645 = vmatmul.bf16.gmra.mxu0 %v149
    %v646 = vpop.f32.mrf.mxu0
    %v647 = vadd.f32 %v634, %v646
    %v648 = vpop.f32.mrf.mxu0
    %649 = vdwg.mxu0
    %650 = vmatpush.bf16.msra.mxu0 0
    %651 = vmatpush.bf16.msra.mxu0 0
    %652 = vmatpush.bf16.msra.mxu0 0
    %653 = vmatpush.bf16.msra.mxu0 %v531
    %654 = vmatpush.bf16.msra.mxu0 %v448
    %655 = vmatpush.bf16.msra.mxu0 %v446
    %656 = vmatpush.bf16.msra.mxu0 %v444
    %657 = vmatpush.bf16.msra.mxu0 %v442
    %658 = vmatmul.bf16.gmra.mxu0 %v524
    %v659 = vpop.f32.mrf.mxu0
    %v660 = vadd.f32 %v647, %v659
    %v661 = vpop.f32.mrf.mxu0
    %662 = vdwg.mxu0
    %v665 = vrot.slane %v660, 4
    %vm666 = vcmask 1043456
    %v667 = vsel %vm666, %v595, %v665
    %669 = vst [vmem:[#allocation8] sm:$0xff] %v667
    // Predicated region
    $region26: #{tpu_custom_call.1} parent=1 // pred_check
      _
    $region27: #{tpu_custom_call.1} parent=1 // pred_check_branch
      %671 = sbr.rel (0) target = $region29
    $region28: #{tpu_custom_call.1} parent=1 // pred_region
      %673 = vsyncadd [#allocation4], 0
      %s675 = sshll.u32 [#allocation8], 4
      %s676 = int_to_ptr.vmem [resolvable:$true] %s675
      %s677 = sshll.u32 %s3, 4
      %s678 = int_to_ptr.hbm [resolvable:$true] %s677
      %680 = dma.vmem_to_hbm [thread:$0]  %s676, 128, %s678, [#allocation4]
    $region29: #{tpu_custom_call.1} parent=1 // pred_fallthru
      _
    // Predicated region
    $region30: #{tpu_custom_call.1} parent=1 // pred_check
      _
    $region31: #{tpu_custom_call.1} parent=1 // pred_check_branch
      %682 = sbr.rel (0) target = $region33
    $region32: #{tpu_custom_call.1} parent=1 // pred_region
      %684 = dma.done [#allocation4], 128
    $region33: #{tpu_custom_call.1} parent=1 // pred_fallthru
      _
    %685 = vsyncpa [#allocation3], 1
    %686 = vsyncpa [#allocation6], 1
    %687 = vsyncpa [#allocation4], 1

</llo_original>
